<compile_context>
chip_gen: v7x
topology: tpu7x:2x2x1
jax: 0.10.0
libtpu: 0.0.40
codegen_flags: <defaults>
</compile_context>

<pallas_src>
import functools
import math

import jax
import jax.numpy as jnp
from jax.experimental import pallas as pl
from jax.experimental.pallas import tpu as pltpu


def _qkv_attn_kernel(q_ref, k_ref, v_ref, o_ref, *, scale, approx_recip):
    """One (head-block, query-tile) grid step.

    q_ref: (Hb, ch, TQ)    k_ref/v_ref: (Hb, ch, L)    o_ref: (Hb, ch, TQ)
    """
    dtype = v_ref.dtype

    # Scale folded into q only (scale == 1/sqrt(ch) == (ch**-0.25)**2); the
    # operands stay in the input dtype so bf16 feeds the MXU natively.
    # TODO(synk): if fp16 inputs are ever used, split the scale across q and k
    # (torch's ch**-0.25 on each) to avoid fp16 overflow.
    q = q_ref[...] * scale                                   # (Hb, ch, TQ)
    k = k_ref[...]                                           # (Hb, ch, L)
    v = v_ref[...]                                           # (Hb, ch, L)

    # scores[h, t, s] = sum_c q[h, c, t] * k[h, c, s]   (f32 accumulation)
    w = jax.lax.dot_general(
        q, k, (((1,), (1,)), ((0,), (0,))),
        preferred_element_type=jnp.float32)                  # (Hb, TQ, L) f32

    # Numerically-stable softmax numerator in f32 (matches torch's
    # softmax(weight.float())); normalization is deferred past the PV matmul.
    w = jnp.exp(w - jnp.max(w, axis=-1, keepdims=True))
    denom = jnp.sum(w, axis=-1, keepdims=True)               # (Hb, TQ, 1) f32
    p = w.astype(dtype)                                      # bf16 MXU operands for bf16 in

    # a[h, t, c] = sum_s p[h, t, s] * v[h, c, s].  M = TQ (not ch), so each
    # MXU weight tile of v is amortized over a full query tile.
    a = jax.lax.dot_general(
        p, v, (((2,), (2,)), ((0,), (0,))),
        preferred_element_type=jnp.float32)                  # (Hb, TQ, ch) f32

    # Deferred normalization on the small (TQ, ch) tile.
    if approx_recip:
        inv = pl.reciprocal(denom, approx=True)              # EUP slot (bf16 path)
    else:
        inv = 1.0 / denom                                    # exact for f32 inputs
    a = a * inv

    # Small (TQ, ch) transpose through the XLU, then lane-dense (ch, TQ) store.
    o_ref[...] = jnp.transpose(a, (0, 2, 1)).astype(o_ref.dtype)


def _vmem_budget():
    """Returns (vmem_limit_bytes for Mosaic, planning budget for tile choice)."""
    cap = 64 * 1024 * 1024                     # conservative fallback (v7x per-core VMEM)
    try:
        cap = int(pltpu.get_tpu_info().vmem_capacity_bytes) or cap
    except Exception:
        pass
    limit = max(32 * 1024 * 1024, int(0.70 * cap))   # ~45 MiB on v7x, ~90 MiB on v5e/v6e
    budget = int(0.70 * limit)                       # slack for Mosaic-internal scratch
    return limit, budget


def _choose_tiles(B, ch, length, itemsize, budget, kv_bufs):
    """Pick (heads-per-step, query-tile) against the per-step VMEM budget."""
    # Query tile: lane-dense multiple of 128 dividing the length; when the
    # length is not 128-aligned, use the full extent (no padding, no key mask).
    if length % 128 == 0:
        tq = 128
        score_cap = min(budget // 3, 16 * 1024 * 1024)   # single-head f32 score tile
        for cand in range(256, min(length, 2048) + 1, 128):
            if length % cand == 0 and cand * length * 4 <= score_cap:
                tq = cand
    else:
        tq = length

    def step_bytes(hb):
        kv = kv_bufs * 2 * hb * ch * length * itemsize   # resident k + v
        qo = 2 * 2 * hb * ch * tq * itemsize             # q + out, double-buffered
        sc = (5 * hb * tq * length * 4) // 4             # f32 scores (exp in place) + 25% margin
        pv = hb * tq * ch * 4                            # f32 PV result
        return kv + qo + sc + pv

    # Leave at least two head-blocks when possible so megacore can shard the
    # head axis without duplicating the resident K/V DMA across cores.
    hb_cap = min(B, 32)
    if B >= 2:
        hb_cap = min(hb_cap, B // 2)
    hb = 1
    for cand in range(hb_cap, 0, -1):
        if B % cand == 0 and step_bytes(cand) <= budget:
            hb = cand
            break
    return hb, tq


def qkv_attention_legacy(qkv, n_heads):
    """Pallas TPU implementation of QKVAttentionLegacy.forward.

    qkv: (bs, 3 * n_heads * ch, length)  ->  (bs, n_heads * ch, length)
    """
    bs, width, length = qkv.shape
    assert width % (3 * n_heads) == 0
    ch = width // (3 * n_heads)
    B = bs * n_heads

    # Free (contiguous) view: within each head, channels are [q | k | v] blocks
    # of size ch.  Passed three times; the BlockSpecs pin the size-3 axis
    # (squeezed, block index 0/1/2) so q/k/v tiles are DMA'd directly out of
    # the packed HBM tensor -- no wrapper-side split/pad HBM round trips.
    qkv_v = qkv.reshape(B, 3, ch, length)

    # Single-buffer the resident K/V blocks (they only change with the head
    # grid index); halves their VMEM footprint.
    kv_kwargs = {}
    kv_bufs = 2
    if hasattr(pl, "Buffered"):
        kv_kwargs = dict(pipeline_mode=pl.Buffered(1))
        kv_bufs = 1

    vmem_limit, budget = _vmem_budget()
    hb, tq = _choose_tiles(B, ch, length, jnp.dtype(qkv.dtype).itemsize,
                           budget, kv_bufs)
    # TODO(synk): for very long sequences (L >= ~8-16K) add an inner key-tile
    # grid axis with online-softmax accumulators instead of fully resident K/V.

    grid = (B // hb, length // tq)
    # Megacore: shard only the head/batch axis so each core keeps its own
    # resident K/V slab; fall back to sharding the q-tile axis when there is
    # only a single head block.
    if grid[0] >= 2:
        dim_sem = ("parallel", "arbitrary")
    else:
        dim_sem = ("arbitrary", "parallel")

    scale = 1.0 / math.sqrt(ch)                    # == (ch ** -0.25) ** 2, folded into q
    approx_recip = qkv.dtype == jnp.bfloat16       # exact divide for f32 inputs

    out = pl.pallas_call(
        functools.partial(_qkv_attn_kernel, scale=scale,
                          approx_recip=approx_recip),
        out_shape=jax.ShapeDtypeStruct((B, ch, length), qkv.dtype),
        grid=grid,
        in_specs=[
            # q: (hb, squeezed, ch, tq), tiled along the query/sequence axis.
            pl.BlockSpec((hb, None, ch, tq), lambda b, t: (b, 0, 0, t)),
            # k, v: resident across the q-tile axis, single-buffered.
            pl.BlockSpec((hb, None, ch, length), lambda b, t: (b, 1, 0, 0),
                         **kv_kwargs),
            pl.BlockSpec((hb, None, ch, length), lambda b, t: (b, 2, 0, 0),
                         **kv_kwargs),
        ],
        out_specs=pl.BlockSpec((hb, ch, tq), lambda b, t: (b, 0, t)),
        compiler_params=pltpu.CompilerParams(
            dimension_semantics=dim_sem,
            vmem_limit_bytes=vmem_limit,
        ),
    )(qkv_v, qkv_v, qkv_v)

    return out.reshape(bs, n_heads * ch, length)


def _reference(qkv, n_heads):
    """Pure-JAX port of the PyTorch forward, for verification."""
    bs, width, length = qkv.shape
    ch = width // (3 * n_heads)
    qkv_r = qkv.reshape(bs * n_heads, 3 * ch, length)
    q, k, v = qkv_r[:, :ch], qkv_r[:, ch:2 * ch], qkv_r[:, 2 * ch:]
    scale = 1.0 / math.sqrt(math.sqrt(ch))
    w = jnp.einsum('bct,bcs->bts', q * scale, k * scale,
                   precision=jax.lax.Precision.HIGHEST)
    w = jax.nn.softmax(w.astype(jnp.float32), axis=-1).astype(w.dtype)
    a = jnp.einsum('bts,bcs->bct', w, v, precision=jax.lax.Precision.HIGHEST)
    return a.reshape(bs, -1, length)


if __name__ == "__main__":
    keys = jax.random.split(jax.random.PRNGKey(0), 3)

    def check(key, bs, n_heads, ch, length, dtype, tol):
        qkv = jax.random.normal(
            key, (bs, 3 * n_heads * ch, length), jnp.float32).astype(dtype)
        out = jax.block_until_ready(qkv_attention_legacy(qkv, n_heads))
        ref = _reference(qkv, n_heads)
        assert out.shape == (bs, n_heads * ch, length), out.shape
        err = float(jnp.max(jnp.abs(out.astype(jnp.float32) -
                                    ref.astype(jnp.float32))))
        assert err < tol, (bs, n_heads, ch, length, str(dtype), err)

    # 128-aligned length (query-tiled path), f32, exact reciprocal.
    check(keys[0], bs=2, n_heads=2, ch=8, length=128, dtype=jnp.float32, tol=2e-3)
    # Ragged length (full-extent block, no pad / no key mask), f32.
    check(keys[1], bs=2, n_heads=3, ch=16, length=80, dtype=jnp.float32, tol=2e-3)
    # bf16 path (approx reciprocal, bf16 MXU operands), UNet-like head dim.
    check(keys[2], bs=1, n_heads=4, ch=64, length=256, dtype=jnp.bfloat16, tol=5e-2)

    print("KERNEL_OK")
</pallas_src>

<mosaic_0001>
module attributes {stable_mosaic.version = 11 : i64} {
  func.func @_qkv_attn_kernel(%arg0: i32, %arg1: i32, %arg2: memref<2x1x8x128xf32, #tpu.memory_space<vmem>>, %arg3: memref<2x1x8x128xf32, #tpu.memory_space<vmem>>, %arg4: memref<2x1x8x128xf32, #tpu.memory_space<vmem>>, %arg5: memref<2x8x128xf32, #tpu.memory_space<vmem>>) attributes {dimension_semantics = [#tpu.dimension_semantics<parallel>, #tpu.dimension_semantics<arbitrary>], iteration_bounds = array<i64: 2, 1>, scalar_prefetch = 0 : i64, scratch_operands = 0 : i64, tpu.core_type = #tpu.core_type<tc>, window_params = [{transform_indices = @transform_0, window_bounds = array<i64: 2, 1, 8, 128>}, {pipeline_mode = #tpu.pipeline_mode<synchronous>, transform_indices = @transform_1, window_bounds = array<i64: 2, 1, 8, 128>}, {pipeline_mode = #tpu.pipeline_mode<synchronous>, transform_indices = @transform_2, window_bounds = array<i64: 2, 1, 8, 128>}, {transform_indices = @transform_3, window_bounds = array<i64: 2, 8, 128>}]} {
    %c0 = arith.constant 0 : index
    %c0_0 = arith.constant 0 : index
    %c0_1 = arith.constant 0 : index
    %c0_2 = arith.constant 0 : index
    %0 = vector.load %arg2[%c0, %c0_0, %c0_1, %c0_2] : memref<2x1x8x128xf32, #tpu.memory_space<vmem>>, vector<2x1x8x128xf32>
    %1 = vector.shape_cast %0 : vector<2x1x8x128xf32> to vector<2x8x128xf32>
    %cst = arith.constant 0.353553385 : f32
    %2 = vector.broadcast %cst : f32 to vector<2x8x128xf32>
    %3 = arith.mulf %1, %2 : vector<2x8x128xf32>
    %c0_3 = arith.constant 0 : index
    %c0_4 = arith.constant 0 : index
    %c0_5 = arith.constant 0 : index
    %c0_6 = arith.constant 0 : index
    %4 = vector.load %arg3[%c0_3, %c0_4, %c0_5, %c0_6] : memref<2x1x8x128xf32, #tpu.memory_space<vmem>>, vector<2x1x8x128xf32>
    %5 = vector.shape_cast %4 : vector<2x1x8x128xf32> to vector<2x8x128xf32>
    %c0_7 = arith.constant 0 : index
    %c0_8 = arith.constant 0 : index
    %c0_9 = arith.constant 0 : index
    %c0_10 = arith.constant 0 : index
    %6 = vector.load %arg4[%c0_7, %c0_8, %c0_9, %c0_10] : memref<2x1x8x128xf32, #tpu.memory_space<vmem>>, vector<2x1x8x128xf32>
    %7 = vector.shape_cast %6 : vector<2x1x8x128xf32> to vector<2x8x128xf32>
    %cst_11 = arith.constant dense<0.000000e+00> : vector<2x128x128xf32>
    %8 = tpu.matmul %3, %5, %cst_11 {dimension_numbers = #tpu.dot_dimension_numbers<[1], [1], [2], [2], [0, 0, 0, 2, 1, 2], [0], [0]>} : vector<2x8x128xf32>, vector<2x8x128xf32>, vector<2x128x128xf32> -> vector<2x128x128xf32>
    %cst_12 = arith.constant dense<0xFF800000> : vector<2x128xf32>
    %9 = vector.multi_reduction <maximumf>, %8, %cst_12 [2] : vector<2x128x128xf32> to vector<2x128xf32>
    %10 = vector.shape_cast %9 : vector<2x128xf32> to vector<2x128x1xf32>
    %11 = vector.broadcast %10 : vector<2x128x1xf32> to vector<2x128x128xf32>
    %12 = arith.subf %8, %11 : vector<2x128x128xf32>
    %13 = math.exp %12 : vector<2x128x128xf32>
    %cst_13 = arith.constant dense<0.000000e+00> : vector<2x128xf32>
    %14 = vector.multi_reduction <add>, %13, %cst_13 [2] : vector<2x128x128xf32> to vector<2x128xf32>
    %15 = vector.shape_cast %14 : vector<2x128xf32> to vector<2x128x1xf32>
    %cst_14 = arith.constant dense<0.000000e+00> : vector<2x128x8xf32>
    %16 = tpu.matmul %13, %7, %cst_14 {dimension_numbers = #tpu.dot_dimension_numbers<[2], [2], [1], [1], [0, 0, 0, 1, 1, 1], [0], [0]>} : vector<2x128x128xf32>, vector<2x8x128xf32>, vector<2x128x8xf32> -> vector<2x128x8xf32>
    %cst_15 = arith.constant 1.000000e+00 : f32
    %17 = vector.broadcast %cst_15 : f32 to vector<2x128x1xf32>
    %18 = arith.divf %17, %15 : vector<2x128x1xf32>
    %19 = vector.broadcast %18 : vector<2x128x1xf32> to vector<2x128x8xf32>
    %20 = arith.mulf %16, %19 : vector<2x128x8xf32>
    %21 = tpu.transpose %20, [0, 2, 1] : vector<2x128x8xf32> -> vector<2x8x128xf32>
    %c0_16 = arith.constant 0 : index
    %c0_17 = arith.constant 0 : index
    %c0_18 = arith.constant 0 : index
    %22 = vector.load %arg5[%c0_16, %c0_17, %c0_18] : memref<2x8x128xf32, #tpu.memory_space<vmem>>, vector<2x8x128xf32>
    tpu.vector_store %arg5[%c0_16, %c0_17, %c0_18], %21 {strides = array<i32>} : memref<2x8x128xf32, #tpu.memory_space<vmem>>, vector<2x8x128xf32>,
    return
  }
  func.func @transform_0(%arg0: i32, %arg1: i32) -> (i32, i32, i32, i32) {
    %c0_i32 = arith.constant 0 : i32
    %c0_i32_0 = arith.constant 0 : i32
    %c0_i32_1 = arith.constant 0 : i32
    return %arg0, %c0_i32, %c0_i32_0, %arg1 : i32, i32, i32, i32
  }
  func.func @transform_1(%arg0: i32, %arg1: i32) -> (i32, i32, i32, i32) {
    %c1_i32 = arith.constant 1 : i32
    %c0_i32 = arith.constant 0 : i32
    %c0_i32_0 = arith.constant 0 : i32
    %c0_i32_1 = arith.constant 0 : i32
    return %arg0, %c1_i32, %c0_i32, %c0_i32_0 : i32, i32, i32, i32
  }
  func.func @transform_2(%arg0: i32, %arg1: i32) -> (i32, i32, i32, i32) {
    %c2_i32 = arith.constant 2 : i32
    %c0_i32 = arith.constant 0 : i32
    %c0_i32_0 = arith.constant 0 : i32
    %c0_i32_1 = arith.constant 0 : i32
    return %arg0, %c2_i32, %c0_i32, %c0_i32_0 : i32, i32, i32, i32
  }
  func.func @transform_3(%arg0: i32, %arg1: i32) -> (i32, i32, i32) {
    %c0_i32 = arith.constant 0 : i32
    %c0_i32_0 = arith.constant 0 : i32
    return %arg0, %c0_i32, %arg1 : i32, i32, i32
  }
}

</mosaic_0001>

<llo_original>
// kernel: tpu_custom_call.1
$region0: #{tpu_custom_call.1}
  #allocation0 [shape = 'u32[]', space=smem, size = 0x4, offset = 0x4, fixed_abs, tag = 'smem constant byte address 0x4 - core index']
  #allocation1 [shape = 'u32[144,128]{1,0:T(1,128)}', space=vmem, size = 0x12000, scoped, tag = 'internal scratch']
  %s0 = inlined_call_operand.hbm [shape: f32[4,3,8,128], index: 0, kind: input, shape index: {}]
  %s1 = inlined_call_operand.hbm [shape: f32[4,3,8,128], index: 1, kind: input, shape index: {}]
  %s2 = inlined_call_operand.hbm [shape: f32[4,3,8,128], index: 2, kind: input, shape index: {}]
  %s3 = inlined_call_operand.hbm [shape: f32[4,8,128], index: 3, kind: output, shape index: {}]
  %s4 = sld [smem:[#allocation0]]
  $region57: #{tpu_custom_call.1} parent=0
    _
  %s6 = ssub.s32 1, %s4
  %s7 = scalar_select 0, %s6, %s4
  $region1: #{tpu_custom_call.1} parent=0
    #allocation2 [shape = 'u8[16384]{0}', space=vmem, size = 0x4000, scoped, tag = 'input window, operand 0']
    #allocation3 [shape = 's32[2]{0}', space=sflag, size = 0x8, scoped, tag = 'scoped memory for tpu_custom_call.1']
    #allocation4 [shape = 's32[2]{0}', space=sflag, size = 0x8, scoped, tag = 'scoped memory for tpu_custom_call.1']
    #allocation5 [shape = 'u8[8192]{0}', space=vmem, size = 0x2000, scoped, tag = 'input window, operand 1, single buffered']
    #allocation6 [shape = 's32[1]{0}', space=sflag, size = 0x4, scoped, tag = 'scoped memory for tpu_custom_call.1']
    #allocation7 [shape = 'u8[8192]{0}', space=vmem, size = 0x2000, scoped, tag = 'input window, operand 2, single buffered']
    #allocation8 [shape = 'u8[16384]{0}', space=vmem, size = 0x4000, scoped, tag = 'output window, operand 0']
    %8 = vsyncpa [#allocation3], 0
    %s9 = scalar_lea.sflag [#allocation3], 1
    %10 = vsyncpa %s9, 0
    %11 = vsyncpa [#allocation6], 0
    %12 = vsyncpa [#allocation4], 0
    %s13 = scalar_lea.sflag [#allocation4], 1
    %14 = vsyncpa %s13, 0
    loop: start=0, step=1, limit=4
    $region2: #{tpu_custom_call.1} parent=1 // loop_pre_header
      _
    $region3: #{tpu_custom_call.1} parent=1 // loop_header
      %s16 = sphi 0, %s20
      %p17 = scmp.ge.s32.totalorder %s16, 4
      %s23 = sphi 0, %s35
      %s24 = sphi 0, %s31
      %s25 = sphi 0, %s23
      %s26 = sphi 0, %s24
      %s27 = sphi 0, %s25
      %s28 = sphi 0, %s26
      %s40 = sphi 0, %s42
      %s43 = sphi 0, %s40
      %s44 = sphi 0, %s43
      %s60 = sphi 0, %s44
      %s66 = sphi 0, %s68
      %s69 = sphi 0, %s66
      %s70 = sphi 0, %s69
      %s86 = sphi 0, %s70
      %s92 = sphi 0, %s94
      %s95 = sphi 0, %s92
      %s96 = sphi 0, %s95
      %s112 = sphi 0, %s96
      %s120 = sphi 0, %s122
      %s123 = sphi 0, %s120
      %s124 = sphi 0, %s123
      %s140 = sphi 0, %s124
    $region4: #{tpu_custom_call.1} parent=1 // loop_header_branch
      %19 = sbr.rel (%p17) target = $region8
    $region5: #{tpu_custom_call.1} parent=1 // loop_body
      %s21 = ssub.s32 %s16, 1
      %s22 = ssub.s32 %s16, 2
      %s29 = sadd.s32 1, %s24
      %p30 = scmp.ge.s32.totalorder %s29, 1
      %s31 = scalar_select %p30, 0, %s29
      %s32 = sadd.s32 1, %s23
      %s33 = scalar_select %p30, %s32, %s23
      %p34 = scmp.ge.s32.totalorder %s33, 2
      %s35 = scalar_select %p34, 0, %s33
      %s36 = ssub.s32 %s23, %s35
      %s37 = ssub.s32 %s24, %s31
      %s38 = sor.u32 %s36, %s37
      %p39 = scmp.eq.s32.totalorder %s38, 0
      %s41 = sadd.s32 %s40, 1
      %s42 = scalar_select %p39, %s40, %s41
      %p45 = pneg %p39
      %p46 = scmp.eq.s32.totalorder %s16, 1
      %p47 = por %p45, %p46
      %p48 = scmp.ne.s32.totalorder %s40, %s43
      %p49 = scmp.eq.s32.totalorder %s16, 0
      %p50 = por %p48, %p49
      %p51 = scmp.ne.s32.totalorder %s40, %s43
      %p52 = scmp.eq.s32.totalorder %s21, 1
      %p53 = por %p51, %p52
      %p54 = scmp.ne.s32.totalorder %s43, %s44
      %p55 = scmp.eq.s32.totalorder %s21, 0
      %p56 = por %p54, %p55
      %p57 = scmp.ne.s32.totalorder %s43, %s44
      %p58 = scmp.eq.s32.totalorder %s22, 1
      %p59 = por %p57, %p58
      %p61 = scmp.ne.s32.totalorder %s44, %s60
      %p62 = scmp.eq.s32.totalorder %s22, 0
      %p63 = por %p61, %p62
      %s64 = ssub.s32 %s23, %s35
      %p65 = scmp.eq.s32.totalorder %s64, 0
      %s67 = sadd.s32 %s66, 1
      %s68 = scalar_select %p65, %s66, %s67
      %p71 = pneg %p65
      %p72 = scmp.eq.s32.totalorder %s16, 1
      %p73 = por %p71, %p72
      %p74 = scmp.ne.s32.totalorder %s66, %s69
      %p75 = scmp.eq.s32.totalorder %s16, 0
      %p76 = por %p74, %p75
      %p77 = scmp.ne.s32.totalorder %s66, %s69
      %p78 = scmp.eq.s32.totalorder %s21, 1
      %p79 = por %p77, %p78
      %p80 = scmp.ne.s32.totalorder %s69, %s70
      %p81 = scmp.eq.s32.totalorder %s21, 0
      %p82 = por %p80, %p81
      %p83 = scmp.ne.s32.totalorder %s69, %s70
      %p84 = scmp.eq.s32.totalorder %s22, 1
      %p85 = por %p83, %p84
      %p87 = scmp.ne.s32.totalorder %s70, %s86
      %p88 = scmp.eq.s32.totalorder %s22, 0
      %p89 = por %p87, %p88
      %s90 = ssub.s32 %s23, %s35
      %p91 = scmp.eq.s32.totalorder %s90, 0
      %s93 = sadd.s32 %s92, 1
      %s94 = scalar_select %p91, %s92, %s93
      %p97 = pneg %p91
      %p98 = scmp.eq.s32.totalorder %s16, 1
      %p99 = por %p97, %p98
      %p100 = scmp.ne.s32.totalorder %s92, %s95
      %p101 = scmp.eq.s32.totalorder %s16, 0
      %p102 = por %p100, %p101
      %p103 = scmp.ne.s32.totalorder %s92, %s95
      %p104 = scmp.eq.s32.totalorder %s21, 1
      %p105 = por %p103, %p104
      %p106 = scmp.ne.s32.totalorder %s95, %s96
      %p107 = scmp.eq.s32.totalorder %s21, 0
      %p108 = por %p106, %p107
      %p109 = scmp.ne.s32.totalorder %s95, %s96
      %p110 = scmp.eq.s32.totalorder %s22, 1
      %p111 = por %p109, %p110
      %p113 = scmp.ne.s32.totalorder %s96, %s112
      %p114 = scmp.eq.s32.totalorder %s22, 0
      %p115 = por %p113, %p114
      %s116 = ssub.s32 %s23, %s35
      %s117 = ssub.s32 %s24, %s31
      %s118 = sor.u32 %s116, %s117
      %p119 = scmp.eq.s32.totalorder %s118, 0
      %s121 = sadd.s32 %s120, 1
      %s122 = scalar_select %p119, %s120, %s121
      %p125 = pneg %p119
      %p126 = scmp.eq.s32.totalorder %s16, 1
      %p127 = por %p125, %p126
      %p128 = scmp.ne.s32.totalorder %s120, %s123
      %p129 = scmp.eq.s32.totalorder %s16, 0
      %p130 = por %p128, %p129
      %p131 = scmp.ne.s32.totalorder %s120, %s123
      %p132 = scmp.eq.s32.totalorder %s21, 1
      %p133 = por %p131, %p132
      %p134 = scmp.ne.s32.totalorder %s123, %s124
      %p135 = scmp.eq.s32.totalorder %s21, 0
      %p136 = por %p134, %p135
      %p137 = scmp.ne.s32.totalorder %s123, %s124
      %p138 = scmp.eq.s32.totalorder %s22, 1
      %p139 = por %p137, %p138
      %p141 = scmp.ne.s32.totalorder %s124, %s140
      %p142 = scmp.eq.s32.totalorder %s22, 0
      %p143 = por %p141, %p142
      %p144 = scmp.le.s32.totalorder 1, %s16
      %p145 = scmp.lt.s32.totalorder %s16, 3
      %p146 = pnand %p144, %p145
      %p147 = pneg %p146
      // Predicated region
      $region9: #{tpu_custom_call.1} parent=5 // pred_check
        _
      $region10: #{tpu_custom_call.1} parent=5 // pred_check_branch
        %149 = sbr.rel (%p146) target = $region12
      $region11: #{tpu_custom_call.1} parent=5 // pred_region
        %s150 = ssub.s32 %s16, 1
        // Predicated region
        $region13: #{tpu_custom_call.1} parent=11 // pred_check
          %p151 = pneg %p82
        $region14: #{tpu_custom_call.1} parent=11 // pred_check_branch
          %153 = sbr.rel (%p151) target = $region16
        $region15: #{tpu_custom_call.1} parent=11 // pred_region
          %s154 = smul.u32 2, %s25
          %s156 = ssub.s32 256, 256
          %157 = vsyncadd [#allocation6], %s156
          %s158 = smul.addr %s154, 3
          %s159 = sadd.s32 1, %s158
          %s160 = smul.addr %s159, 128
          %s161 = scalar_lea.hbm %s1, %s160
          %s162 = sshll.u32 [#allocation5], 4
          %s163 = int_to_ptr.vmem [resolvable:$true] %s162
          %168 = dma.hbm_to_vmem [thread:$0]  %s161, 256, %s163, [#allocation6], 384, 128, 8
        $region16: #{tpu_custom_call.1} parent=11 // pred_fallthru
          _
        // Predicated region
        $region17: #{tpu_custom_call.1} parent=11 // pred_check
          %p169 = pneg %p108
        $region18: #{tpu_custom_call.1} parent=11 // pred_check_branch
          %171 = sbr.rel (%p169) target = $region20
        $region19: #{tpu_custom_call.1} parent=11 // pred_region
          %s172 = smul.u32 2, %s25
          %s174 = ssub.s32 256, 256
          %175 = vsyncadd [#allocation6], %s174
          %s176 = smul.addr %s172, 3
          %s177 = sadd.s32 2, %s176
          %s178 = smul.addr %s177, 128
          %s179 = scalar_lea.hbm %s2, %s178
          %s180 = sshll.u32 [#allocation7], 4
          %s181 = int_to_ptr.vmem [resolvable:$true] %s180
          %186 = dma.hbm_to_vmem [thread:$0]  %s179, 256, %s181, [#allocation6], 384, 128, 8
        $region20: #{tpu_custom_call.1} parent=11 // pred_fallthru
          _
      $region12: #{tpu_custom_call.1} parent=5 // pred_fallthru
        _
      %p187 = scmp.lt.s32.totalorder %s16, 2
      // Predicated region
      $region21: #{tpu_custom_call.1} parent=5 // pred_check
        %p188 = pneg %p187
      $region22: #{tpu_custom_call.1} parent=5 // pred_check_branch
        %190 = sbr.rel (%p188) target = $region24
      $region23: #{tpu_custom_call.1} parent=5 // pred_region
        // Predicated region
        $region25: #{tpu_custom_call.1} parent=23 // pred_check
          %p191 = pneg %p50
        $region26: #{tpu_custom_call.1} parent=23 // pred_check_branch
          %193 = sbr.rel (%p191) target = $region28
        $region27: #{tpu_custom_call.1} parent=23 // pred_region
          %s194 = sand.u32 %s40, 1
          %s195 = scalar_lea.sflag [#allocation3], %s194
          %s196 = sand.u32 %s40, 1
          %s197 = smul.addr %s196, 16
          %s198 = scalar_lea.vmem [#allocation2], %s197
          %s199 = smul.u32 2, %s23
          %s201 = ssub.s32 256, 256
          %202 = vsyncadd %s195, %s201
          %s203 = smul.addr %s199, 3
          %s204 = sadd.s32 %s24, %s203
          %s205 = smul.addr %s204, 128
          %s206 = scalar_lea.hbm %s0, %s205
          %s207 = sshll.u32 %s198, 4
          %s208 = int_to_ptr.vmem [resolvable:$true] %s207
          %213 = dma.hbm_to_vmem [thread:$0]  %s206, 256, %s208, %s195, 384, 128, 8
        $region28: #{tpu_custom_call.1} parent=23 // pred_fallthru
          _
      $region24: #{tpu_custom_call.1} parent=5 // pred_fallthru
        _
      %p214 = scmp.le.s32.totalorder 1, %s16
      %p215 = scmp.lt.s32.totalorder %s16, 3
      %p216 = pnand %p214, %p215
      %p217 = pneg %p216
      // Predicated region
      $region29: #{tpu_custom_call.1} parent=5 // pred_check
        _
      $region30: #{tpu_custom_call.1} parent=5 // pred_check_branch
        %219 = sbr.rel (%p216) target = $region32
      $region31: #{tpu_custom_call.1} parent=5 // pred_region
        %s220 = ssub.s32 %s16, 1
        %s221 = sand.u32 %s43, 1
        %s222 = scalar_lea.sflag [#allocation3], %s221
        %s223 = sand.u32 %s43, 1
        %s224 = smul.addr %s223, 16
        %s225 = scalar_lea.vmem [#allocation2], %s224
        // Predicated region
        $region33: #{tpu_custom_call.1} parent=31 // pred_check
          %p226 = pneg %p56
        $region34: #{tpu_custom_call.1} parent=31 // pred_check_branch
          %228 = sbr.rel (%p226) target = $region36
        $region35: #{tpu_custom_call.1} parent=31 // pred_region
          %229 = dma.done %s222, 256
        $region36: #{tpu_custom_call.1} parent=31 // pred_fallthru
          _
        // Predicated region
        $region37: #{tpu_custom_call.1} parent=31 // pred_check
          %p230 = pneg %p82
        $region38: #{tpu_custom_call.1} parent=31 // pred_check_branch
          %232 = sbr.rel (%p230) target = $region40
        $region39: #{tpu_custom_call.1} parent=31 // pred_region
          %233 = dma.done [#allocation6], 256
        $region40: #{tpu_custom_call.1} parent=31 // pred_fallthru
          _
        // Predicated region
        $region41: #{tpu_custom_call.1} parent=31 // pred_check
          %p234 = pneg %p108
        $region42: #{tpu_custom_call.1} parent=31 // pred_check_branch
          %236 = sbr.rel (%p234) target = $region44
        $region43: #{tpu_custom_call.1} parent=31 // pred_region
          %237 = dma.done [#allocation6], 256
        $region44: #{tpu_custom_call.1} parent=31 // pred_fallthru
          _
        %s238 = sand.u32 %s43, 1
        %s239 = scalar_lea.sflag [#allocation3], %s238
        %s240 = sand.u32 %s43, 1
        %s241 = smul.addr %s240, 16
        %s242 = scalar_lea.vmem [#allocation2], %s241
        %p243 = pneg %p56
        %p244 = pneg %p53
        %p245 = pneg %p82
        %p246 = pneg %p79
        %p247 = pneg %p108
        %p248 = pneg %p105
        %p249 = pneg %p136
        %p250 = pneg %p133
        %s251 = sand.u32 %s123, 1
        %s252 = scalar_lea.sflag [#allocation4], %s251
        %s253 = sand.u32 %s123, 1
        %s254 = smul.addr %s253, 16
        %s255 = scalar_lea.vmem [#allocation8], %s254
        %s256 = smul.u32 2, %s25
        %s257 = smul.u32 2, %s25
        %s258 = smul.u32 2, %s25
        %s259 = smul.u32 2, %s25
        %v260 = vld [vmem:[%s225] sm:$0xff]
        %v261 = vld [vmem:[%s225 + $0x8] sm:$0xff]
        %v262 = vmul.f32 %v260, 0.35355338
        %v263 = vmul.f32 %v261, 0.35355338
        %v264 = vld [vmem:[#allocation5] sm:$0xff]
        %v265 = vld [vmem:[#allocation5 + $0x8] sm:$0xff]
        %v266 = vld [vmem:[#allocation7] sm:$0xff]
        %v267 = vld [vmem:[#allocation7 + $0x8] sm:$0xff]
        %268 = vxpose.xlu0.b32.start [1/16] %v262, 128
        %269 = vxpose.xlu0.b32.cont [2/16] 0.0, 128
        %270 = vxpose.xlu0.b32.cont [3/16] 0.0, 128
        %271 = vxpose.xlu0.b32.cont [4/16] 0.0, 128
        %272 = vxpose.xlu0.b32.cont [5/16] 0.0, 128
        %273 = vxpose.xlu0.b32.cont [6/16] 0.0, 128
        %274 = vxpose.xlu0.b32.cont [7/16] 0.0, 128
        %275 = vxpose.xlu0.b32.cont [8/16] 0.0, 128
        %276 = vxpose.xlu0.b32.cont [9/16] 0.0, 128
        %277 = vxpose.xlu0.b32.cont [10/16] 0.0, 128
        %278 = vxpose.xlu0.b32.cont [11/16] 0.0, 128
        %279 = vxpose.xlu0.b32.cont [12/16] 0.0, 128
        %280 = vxpose.xlu0.b32.cont [13/16] 0.0, 128
        %281 = vxpose.xlu0.b32.cont [14/16] 0.0, 128
        %282 = vxpose.xlu0.b32.cont [15/16] 0.0, 128
        %283 = vxpose.xlu0.b32.end [16/16] 0.0, 128
        %v284 = vpop.trf.xlu0
        %v285 = vpop.trf.xlu0
        %v286 = vpop.trf.xlu0
        %v287 = vpop.trf.xlu0
        %v288 = vpop.trf.xlu0
        %v289 = vpop.trf.xlu0
        %v290 = vpop.trf.xlu0
        %v291 = vpop.trf.xlu0
        %v292 = vpop.trf.xlu0
        %v293 = vpop.trf.xlu0
        %v294 = vpop.trf.xlu0
        %v295 = vpop.trf.xlu0
        %v296 = vpop.trf.xlu0
        %v297 = vpop.trf.xlu0
        %v298 = vpop.trf.xlu0
        %v299 = vpop.trf.xlu0
        %vm300 = vcmask 64512
        %v302 = vsel %vm300, %v284, 0
        %v305 = vsel %vm300, %v285, 0
        %v308 = vsel %vm300, %v286, 0
        %v311 = vsel %vm300, %v287, 0
        %v314 = vsel %vm300, %v288, 0
        %v317 = vsel %vm300, %v289, 0
        %v320 = vsel %vm300, %v290, 0
        %v323 = vsel %vm300, %v291, 0
        %v326 = vsel %vm300, %v292, 0
        %v329 = vsel %vm300, %v293, 0
        %v332 = vsel %vm300, %v294, 0
        %v335 = vsel %vm300, %v295, 0
        %v338 = vsel %vm300, %v296, 0
        %v341 = vsel %vm300, %v297, 0
        %v344 = vsel %vm300, %v298, 0
        %v347 = vsel %vm300, %v299, 0
        %349 = vmatprep.subr.mxu0 0.0
        %350 = vmatpush1.msra.mxu0 %v264
        %351 = vmatprep.subr.mxu0 0.0
        %352 = vmatpush1.msra.mxu0 0.0
        %353 = vmatprep.subr.mxu0 0.0
        %354 = vmatpush1.msra.mxu0 0.0
        %355 = vmatprep.subr.mxu0 0.0
        %356 = vmatpush1.msra.mxu0 0.0
        %357 = vmatprep.subr.mxu0 0.0
        %358 = vmatpush1.msra.mxu0 0.0
        %359 = vmatprep.subr.mxu0 0.0
        %360 = vmatpush1.msra.mxu0 0.0
        %361 = vmatprep.subr.mxu0 0.0
        %362 = vmatpush1.msra.mxu0 0.0
        %363 = vmatprep.subr.mxu0 0.0
        %364 = vmatpush1.msra.mxu0 0.0
        %365 = vmatprep.subr.mxu0 0.0
        %366 = vmatpush1.msra.mxu0 0.0
        %367 = vmatprep.subr.mxu0 0.0
        %368 = vmatpush1.msra.mxu0 0.0
        %369 = vmatprep.subr.mxu0 0.0
        %370 = vmatpush1.msra.mxu0 0.0
        %371 = vmatprep.subr.mxu0 0.0
        %372 = vmatpush1.msra.mxu0 0.0
        %373 = vmatprep.subr.mxu0 0.0
        %374 = vmatpush1.msra.mxu0 0.0
        %375 = vmatprep.subr.mxu0 0.0
        %376 = vmatpush1.msra.mxu0 0.0
        %377 = vmatprep.subr.mxu0 0.0
        %378 = vmatpush1.msra.mxu0 0.0
        %379 = vmatprep.subr.mxu0 0.0
        %380 = vmatpush1.msra.mxu0 0.0
        %381 = vmatprep.subr.mxu0 0.0
        %382 = vmatpush1.msra.mxu0 0.0
        %383 = vmatprep.subr.mxu0 0.0
        %384 = vmatpush1.msra.mxu0 0.0
        %385 = vmatprep.subr.mxu0 0.0
        %386 = vmatpush1.msra.mxu0 0.0
        %387 = vmatprep.subr.mxu0 0.0
        %388 = vmatpush1.msra.mxu0 0.0
        %389 = vmatprep.subr.mxu0 0.0
        %390 = vmatpush1.msra.mxu0 0.0
        %391 = vmatprep.subr.mxu0 0.0
        %392 = vmatpush1.msra.mxu0 0.0
        %393 = vmatprep.subr.mxu0 0.0
        %394 = vmatpush1.msra.mxu0 0.0
        %395 = vmatprep.subr.mxu0 0.0
        %396 = vmatpush1.msra.mxu0 0.0
        %397 = vmatprep.subr.mxu0 0.0
        %398 = vmatpush1.msra.mxu0 0.0
        %399 = vmatprep.subr.mxu0 0.0
        %400 = vmatpush1.msra.mxu0 0.0
        %401 = vmatprep.subr.mxu0 0.0
        %402 = vmatpush1.msra.mxu0 0.0
        %403 = vmatprep.subr.mxu0 0.0
        %404 = vmatpush1.msra.mxu0 0.0
        %405 = vmatprep.subr.mxu0 0.0
        %406 = vmatpush1.msra.mxu0 0.0
        %407 = vmatprep.subr.mxu0 0.0
        %408 = vmatpush1.msra.mxu0 0.0
        %409 = vmatprep.subr.mxu0 0.0
        %410 = vmatpush1.msra.mxu0 0.0
        %411 = vmatprep.subr.mxu0 0.0
        %412 = vmatpush1.msra.mxu0 0.0
        %413 = vmatprep.mubr.f32.mxu0 0.0
        %414 = vmatmul.mubr.f32.gmra.mrb[0].mxu0 %v302
        %v415 = vpop.f32.mrb[0].mxu0
        %v416 = vadd.f32 0.0, %v415
        %v417 = vpop.f32.mrb[0].mxu0
        %418 = vmatprep.mubr.f32.mxu0 0.0
        %419 = vmatmul.mubr.f32.gmra.mrb[0].mxu0 %v305
        %v420 = vpop.f32.mrb[0].mxu0
        %v421 = vadd.f32 0.0, %v420
        %v422 = vpop.f32.mrb[0].mxu0
        %423 = vmatprep.mubr.f32.mxu0 0.0
        %424 = vmatmul.mubr.f32.gmra.mrb[0].mxu0 %v308
        %v425 = vpop.f32.mrb[0].mxu0
        %v426 = vadd.f32 0.0, %v425
        %v427 = vpop.f32.mrb[0].mxu0
        %428 = vmatprep.mubr.f32.mxu0 0.0
        %429 = vmatmul.mubr.f32.gmra.mrb[0].mxu0 %v311
        %v430 = vpop.f32.mrb[0].mxu0
        %v431 = vadd.f32 0.0, %v430
        %v432 = vpop.f32.mrb[0].mxu0
        %433 = vmatprep.mubr.f32.mxu0 0.0
        %434 = vmatmul.mubr.f32.gmra.mrb[0].mxu0 %v314
        %v435 = vpop.f32.mrb[0].mxu0
        %v436 = vadd.f32 0.0, %v435
        %v437 = vpop.f32.mrb[0].mxu0
        %438 = vmatprep.mubr.f32.mxu0 0.0
        %439 = vmatmul.mubr.f32.gmra.mrb[0].mxu0 %v317
        %v440 = vpop.f32.mrb[0].mxu0
        %v441 = vadd.f32 0.0, %v440
        %v442 = vpop.f32.mrb[0].mxu0
        %443 = vmatprep.mubr.f32.mxu0 0.0
        %444 = vmatmul.mubr.f32.gmra.mrb[0].mxu0 %v320
        %v445 = vpop.f32.mrb[0].mxu0
        %v446 = vadd.f32 0.0, %v445
        %v447 = vpop.f32.mrb[0].mxu0
        %448 = vmatprep.mubr.f32.mxu0 0.0
        %449 = vmatmul.mubr.f32.gmra.mrb[0].mxu0 %v323
        %v450 = vpop.f32.mrb[0].mxu0
        %v451 = vadd.f32 0.0, %v450
        %v452 = vpop.f32.mrb[0].mxu0
        %453 = vmatprep.mubr.f32.mxu0 0.0
        %454 = vmatmul.mubr.f32.gmra.mrb[0].mxu0 %v326
        %v455 = vpop.f32.mrb[0].mxu0
        %v456 = vadd.f32 0.0, %v455
        %v457 = vpop.f32.mrb[0].mxu0
        %458 = vmatprep.mubr.f32.mxu0 0.0
        %459 = vmatmul.mubr.f32.gmra.mrb[0].mxu0 %v329
        %v460 = vpop.f32.mrb[0].mxu0
        %v461 = vadd.f32 0.0, %v460
        %v462 = vpop.f32.mrb[0].mxu0
        %463 = vmatprep.mubr.f32.mxu0 0.0
        %464 = vmatmul.mubr.f32.gmra.mrb[0].mxu0 %v332
        %v465 = vpop.f32.mrb[0].mxu0
        %v466 = vadd.f32 0.0, %v465
        %v467 = vpop.f32.mrb[0].mxu0
        %468 = vmatprep.mubr.f32.mxu0 0.0
        %469 = vmatmul.mubr.f32.gmra.mrb[0].mxu0 %v335
        %v470 = vpop.f32.mrb[0].mxu0
        %v471 = vadd.f32 0.0, %v470
        %v472 = vpop.f32.mrb[0].mxu0
        %473 = vmatprep.mubr.f32.mxu0 0.0
        %474 = vmatmul.mubr.f32.gmra.mrb[0].mxu0 %v338
        %v475 = vpop.f32.mrb[0].mxu0
        %v476 = vadd.f32 0.0, %v475
        %v477 = vpop.f32.mrb[0].mxu0
        %478 = vmatprep.mubr.f32.mxu0 0.0
        %479 = vmatmul.mubr.f32.gmra.mrb[0].mxu0 %v341
        %v480 = vpop.f32.mrb[0].mxu0
        %v481 = vadd.f32 0.0, %v480
        %v482 = vpop.f32.mrb[0].mxu0
        %483 = vmatprep.mubr.f32.mxu0 0.0
        %484 = vmatmul.mubr.f32.gmra.mrb[0].mxu0 %v344
        %v485 = vpop.f32.mrb[0].mxu0
        %v486 = vadd.f32 0.0, %v485
        %v487 = vpop.f32.mrb[0].mxu0
        %488 = vmatprep.mubr.f32.mxu0 0.0
        %489 = vmatmul.mubr.f32.gmra.mrb[0].mxu0 %v347
        %v490 = vpop.f32.mrb[0].mxu0
        %v491 = vadd.f32 0.0, %v490
        %v492 = vpop.f32.mrb[0].mxu0
        %493 = vdwg.mxu0
        %494 = vxpose.xlu0.b32.start [1/16] %v263, 128
        %495 = vxpose.xlu0.b32.cont [2/16] 0.0, 128
        %496 = vxpose.xlu0.b32.cont [3/16] 0.0, 128
        %497 = vxpose.xlu0.b32.cont [4/16] 0.0, 128
        %498 = vxpose.xlu0.b32.cont [5/16] 0.0, 128
        %499 = vxpose.xlu0.b32.cont [6/16] 0.0, 128
        %500 = vxpose.xlu0.b32.cont [7/16] 0.0, 128
        %501 = vxpose.xlu0.b32.cont [8/16] 0.0, 128
        %502 = vxpose.xlu0.b32.cont [9/16] 0.0, 128
        %503 = vxpose.xlu0.b32.cont [10/16] 0.0, 128
        %504 = vxpose.xlu0.b32.cont [11/16] 0.0, 128
        %505 = vxpose.xlu0.b32.cont [12/16] 0.0, 128
        %506 = vxpose.xlu0.b32.cont [13/16] 0.0, 128
        %507 = vxpose.xlu0.b32.cont [14/16] 0.0, 128
        %508 = vxpose.xlu0.b32.cont [15/16] 0.0, 128
        %509 = vxpose.xlu0.b32.end [16/16] 0.0, 128
        %v510 = vpop.trf.xlu0
        %v511 = vpop.trf.xlu0
        %v512 = vpop.trf.xlu0
        %v513 = vpop.trf.xlu0
        %v514 = vpop.trf.xlu0
        %v515 = vpop.trf.xlu0
        %v516 = vpop.trf.xlu0
        %v517 = vpop.trf.xlu0
        %v518 = vpop.trf.xlu0
        %v519 = vpop.trf.xlu0
        %v520 = vpop.trf.xlu0
        %v521 = vpop.trf.xlu0
        %v522 = vpop.trf.xlu0
        %v523 = vpop.trf.xlu0
        %v524 = vpop.trf.xlu0
        %v525 = vpop.trf.xlu0
        %v527 = vsel %vm300, %v510, 0
        %v530 = vsel %vm300, %v511, 0
        %v533 = vsel %vm300, %v512, 0
        %v536 = vsel %vm300, %v513, 0
        %v539 = vsel %vm300, %v514, 0
        %v542 = vsel %vm300, %v515, 0
        %v545 = vsel %vm300, %v516, 0
        %v548 = vsel %vm300, %v517, 0
        %v551 = vsel %vm300, %v518, 0
        %v554 = vsel %vm300, %v519, 0
        %v557 = vsel %vm300, %v520, 0
        %v560 = vsel %vm300, %v521, 0
        %v563 = vsel %vm300, %v522, 0
        %v566 = vsel %vm300, %v523, 0
        %v569 = vsel %vm300, %v524, 0
        %v572 = vsel %vm300, %v525, 0
        %574 = vmatprep.subr.mxu0 0.0
        %575 = vmatpush1.msra.mxu0 %v265
        %576 = vmatprep.subr.mxu0 0.0
        %577 = vmatpush1.msra.mxu0 0.0
        %578 = vmatprep.subr.mxu0 0.0
        %579 = vmatpush1.msra.mxu0 0.0
        %580 = vmatprep.subr.mxu0 0.0
        %581 = vmatpush1.msra.mxu0 0.0
        %582 = vmatprep.subr.mxu0 0.0
        %583 = vmatpush1.msra.mxu0 0.0
        %584 = vmatprep.subr.mxu0 0.0
        %585 = vmatpush1.msra.mxu0 0.0
        %586 = vmatprep.subr.mxu0 0.0
        %587 = vmatpush1.msra.mxu0 0.0
        %588 = vmatprep.subr.mxu0 0.0
        %589 = vmatpush1.msra.mxu0 0.0
        %590 = vmatprep.subr.mxu0 0.0
        %591 = vmatpush1.msra.mxu0 0.0
        %592 = vmatprep.subr.mxu0 0.0
        %593 = vmatpush1.msra.mxu0 0.0
        %594 = vmatprep.subr.mxu0 0.0
        %595 = vmatpush1.msra.mxu0 0.0
        %596 = vmatprep.subr.mxu0 0.0
        %597 = vmatpush1.msra.mxu0 0.0
        %598 = vmatprep.subr.mxu0 0.0
        %599 = vmatpush1.msra.mxu0 0.0
        %600 = vmatprep.subr.mxu0 0.0
        %601 = vmatpush1.msra.mxu0 0.0
        %602 = vmatprep.subr.mxu0 0.0
        %603 = vmatpush1.msra.mxu0 0.0
        %604 = vmatprep.subr.mxu0 0.0
        %605 = vmatpush1.msra.mxu0 0.0
        %606 = vmatprep.subr.mxu0 0.0
        %607 = vmatpush1.msra.mxu0 0.0
        %608 = vmatprep.subr.mxu0 0.0
        %609 = vmatpush1.msra.mxu0 0.0
        %610 = vmatprep.subr.mxu0 0.0
        %611 = vmatpush1.msra.mxu0 0.0
        %612 = vmatprep.subr.mxu0 0.0
        %613 = vmatpush1.msra.mxu0 0.0
        %614 = vmatprep.subr.mxu0 0.0
        %615 = vmatpush1.msra.mxu0 0.0
        %616 = vmatprep.subr.mxu0 0.0
        %617 = vmatpush1.msra.mxu0 0.0
        %618 = vmatprep.subr.mxu0 0.0
        %619 = vmatpush1.msra.mxu0 0.0
        %620 = vmatprep.subr.mxu0 0.0
        %621 = vmatpush1.msra.mxu0 0.0
        %622 = vmatprep.subr.mxu0 0.0
        %623 = vmatpush1.msra.mxu0 0.0
        %624 = vmatprep.subr.mxu0 0.0
        %625 = vmatpush1.msra.mxu0 0.0
        %626 = vmatprep.subr.mxu0 0.0
        %627 = vmatpush1.msra.mxu0 0.0
        %628 = vmatprep.subr.mxu0 0.0
        %629 = vmatpush1.msra.mxu0 0.0
        %630 = vmatprep.subr.mxu0 0.0
        %631 = vmatpush1.msra.mxu0 0.0
        %632 = vmatprep.subr.mxu0 0.0
        %633 = vmatpush1.msra.mxu0 0.0
        %634 = vmatprep.subr.mxu0 0.0
        %635 = vmatpush1.msra.mxu0 0.0
        %636 = vmatprep.subr.mxu0 0.0
        %637 = vmatpush1.msra.mxu0 0.0
        %638 = vmatprep.mubr.f32.mxu0 0.0
        %639 = vmatmul.mubr.f32.gmra.mrb[0].mxu0 %v527
        %v640 = vpop.f32.mrb[0].mxu0
        %v641 = vadd.f32 0.0, %v640
        %v642 = vpop.f32.mrb[0].mxu0
        %643 = vmatprep.mubr.f32.mxu0 0.0
        %644 = vmatmul.mubr.f32.gmra.mrb[0].mxu0 %v530
        %v645 = vpop.f32.mrb[0].mxu0
        %v646 = vadd.f32 0.0, %v645
        %v647 = vpop.f32.mrb[0].mxu0
        %648 = vmatprep.mubr.f32.mxu0 0.0
        %649 = vmatmul.mubr.f32.gmra.mrb[0].mxu0 %v533
        %v650 = vpop.f32.mrb[0].mxu0
        %v651 = vadd.f32 0.0, %v650
        %v652 = vpop.f32.mrb[0].mxu0
        %653 = vmatprep.mubr.f32.mxu0 0.0
        %654 = vmatmul.mubr.f32.gmra.mrb[0].mxu0 %v536
        %v655 = vpop.f32.mrb[0].mxu0
        %v656 = vadd.f32 0.0, %v655
        %v657 = vpop.f32.mrb[0].mxu0
        %658 = vmatprep.mubr.f32.mxu0 0.0
        %659 = vmatmul.mubr.f32.gmra.mrb[0].mxu0 %v539
        %v660 = vpop.f32.mrb[0].mxu0
        %v661 = vadd.f32 0.0, %v660
        %v662 = vpop.f32.mrb[0].mxu0
        %663 = vmatprep.mubr.f32.mxu0 0.0
        %664 = vmatmul.mubr.f32.gmra.mrb[0].mxu0 %v542
        %v665 = vpop.f32.mrb[0].mxu0
        %v666 = vadd.f32 0.0, %v665
        %v667 = vpop.f32.mrb[0].mxu0
        %668 = vmatprep.mubr.f32.mxu0 0.0
        %669 = vmatmul.mubr.f32.gmra.mrb[0].mxu0 %v545
        %v670 = vpop.f32.mrb[0].mxu0
        %v671 = vadd.f32 0.0, %v670
        %v672 = vpop.f32.mrb[0].mxu0
        %673 = vmatprep.mubr.f32.mxu0 0.0
        %674 = vmatmul.mubr.f32.gmra.mrb[0].mxu0 %v548
        %v675 = vpop.f32.mrb[0].mxu0
        %v676 = vadd.f32 0.0, %v675
        %v677 = vpop.f32.mrb[0].mxu0
        %678 = vmatprep.mubr.f32.mxu0 0.0
        %679 = vmatmul.mubr.f32.gmra.mrb[0].mxu0 %v551
        %v680 = vpop.f32.mrb[0].mxu0
        %v681 = vadd.f32 0.0, %v680
        %v682 = vpop.f32.mrb[0].mxu0
        %683 = vmatprep.mubr.f32.mxu0 0.0
        %684 = vmatmul.mubr.f32.gmra.mrb[0].mxu0 %v554
        %v685 = vpop.f32.mrb[0].mxu0
        %v686 = vadd.f32 0.0, %v685
        %v687 = vpop.f32.mrb[0].mxu0
        %688 = vmatprep.mubr.f32.mxu0 0.0
        %689 = vmatmul.mubr.f32.gmra.mrb[0].mxu0 %v557
        %v690 = vpop.f32.mrb[0].mxu0
        %v691 = vadd.f32 0.0, %v690
        %v692 = vpop.f32.mrb[0].mxu0
        %693 = vmatprep.mubr.f32.mxu0 0.0
        %694 = vmatmul.mubr.f32.gmra.mrb[0].mxu0 %v560
        %v695 = vpop.f32.mrb[0].mxu0
        %v696 = vadd.f32 0.0, %v695
        %v697 = vpop.f32.mrb[0].mxu0
        %698 = vmatprep.mubr.f32.mxu0 0.0
        %699 = vmatmul.mubr.f32.gmra.mrb[0].mxu0 %v563
        %v700 = vpop.f32.mrb[0].mxu0
        %v701 = vadd.f32 0.0, %v700
        %v702 = vpop.f32.mrb[0].mxu0
        %703 = vmatprep.mubr.f32.mxu0 0.0
        %704 = vmatmul.mubr.f32.gmra.mrb[0].mxu0 %v566
        %v705 = vpop.f32.mrb[0].mxu0
        %v706 = vadd.f32 0.0, %v705
        %v707 = vpop.f32.mrb[0].mxu0
        %708 = vmatprep.mubr.f32.mxu0 0.0
        %709 = vmatmul.mubr.f32.gmra.mrb[0].mxu0 %v569
        %v710 = vpop.f32.mrb[0].mxu0
        %v711 = vadd.f32 0.0, %v710
        %v712 = vpop.f32.mrb[0].mxu0
        %713 = vmatprep.mubr.f32.mxu0 0.0
        %714 = vmatmul.mubr.f32.gmra.mrb[0].mxu0 %v572
        %v715 = vpop.f32.mrb[0].mxu0
        %v716 = vadd.f32 0.0, %v715
        %v717 = vpop.f32.mrb[0].mxu0
        %718 = vdwg.mxu0
        %719 = vmax.xlane.f32.xlu0 %v416
        %v720 = vpop.xlane.xlu0 %719
        %721 = vmax.xlane.f32.xlu0 %v421
        %v722 = vpop.xlane.xlu0 %721
        %723 = vmax.xlane.f32.xlu0 %v426
        %v724 = vpop.xlane.xlu0 %723
        %725 = vmax.xlane.f32.xlu0 %v431
        %v726 = vpop.xlane.xlu0 %725
        %727 = vmax.xlane.f32.xlu0 %v436
        %v728 = vpop.xlane.xlu0 %727
        %729 = vmax.xlane.f32.xlu0 %v441
        %v730 = vpop.xlane.xlu0 %729
        %731 = vmax.xlane.f32.xlu0 %v446
        %v732 = vpop.xlane.xlu0 %731
        %733 = vmax.xlane.f32.xlu0 %v451
        %v734 = vpop.xlane.xlu0 %733
        %735 = vmax.xlane.f32.xlu0 %v456
        %v736 = vpop.xlane.xlu0 %735
        %737 = vmax.xlane.f32.xlu0 %v461
        %v738 = vpop.xlane.xlu0 %737
        %739 = vmax.xlane.f32.xlu0 %v466
        %v740 = vpop.xlane.xlu0 %739
        %741 = vmax.xlane.f32.xlu0 %v471
        %v742 = vpop.xlane.xlu0 %741
        %743 = vmax.xlane.f32.xlu0 %v476
        %v744 = vpop.xlane.xlu0 %743
        %745 = vmax.xlane.f32.xlu0 %v481
        %v746 = vpop.xlane.xlu0 %745
        %747 = vmax.xlane.f32.xlu0 %v486
        %v748 = vpop.xlane.xlu0 %747
        %749 = vmax.xlane.f32.xlu0 %v491
        %v750 = vpop.xlane.xlu0 %749
        %751 = vmax.xlane.f32.xlu0 %v641
        %v752 = vpop.xlane.xlu0 %751
        %753 = vmax.xlane.f32.xlu0 %v646
        %v754 = vpop.xlane.xlu0 %753
        %755 = vmax.xlane.f32.xlu0 %v651
        %v756 = vpop.xlane.xlu0 %755
        %757 = vmax.xlane.f32.xlu0 %v656
        %v758 = vpop.xlane.xlu0 %757
        %759 = vmax.xlane.f32.xlu0 %v661
        %v760 = vpop.xlane.xlu0 %759
        %761 = vmax.xlane.f32.xlu0 %v666
        %v762 = vpop.xlane.xlu0 %761
        %763 = vmax.xlane.f32.xlu0 %v671
        %v764 = vpop.xlane.xlu0 %763
        %765 = vmax.xlane.f32.xlu0 %v676
        %v766 = vpop.xlane.xlu0 %765
        %767 = vmax.xlane.f32.xlu0 %v681
        %v768 = vpop.xlane.xlu0 %767
        %769 = vmax.xlane.f32.xlu0 %v686
        %v770 = vpop.xlane.xlu0 %769
        %771 = vmax.xlane.f32.xlu0 %v691
        %v772 = vpop.xlane.xlu0 %771
        %773 = vmax.xlane.f32.xlu0 %v696
        %v774 = vpop.xlane.xlu0 %773
        %775 = vmax.xlane.f32.xlu0 %v701
        %v776 = vpop.xlane.xlu0 %775
        %777 = vmax.xlane.f32.xlu0 %v706
        %v778 = vpop.xlane.xlu0 %777
        %779 = vmax.xlane.f32.xlu0 %v711
        %v780 = vpop.xlane.xlu0 %779
        %781 = vmax.xlane.f32.xlu0 %v716
        %v782 = vpop.xlane.xlu0 %781
        %v783 = vsub.f32 %v416, %v720
        %v784 = vsub.f32 %v421, %v722
        %v785 = vsub.f32 %v426, %v724
        %v786 = vsub.f32 %v431, %v726
        %v787 = vsub.f32 %v436, %v728
        %v788 = vsub.f32 %v441, %v730
        %v789 = vsub.f32 %v446, %v732
        %v790 = vsub.f32 %v451, %v734
        %v791 = vsub.f32 %v456, %v736
        %v792 = vsub.f32 %v461, %v738
        %v793 = vsub.f32 %v466, %v740
        %v794 = vsub.f32 %v471, %v742
        %v795 = vsub.f32 %v476, %v744
        %v796 = vsub.f32 %v481, %v746
        %v797 = vsub.f32 %v486, %v748
        %v798 = vsub.f32 %v491, %v750
        %v799 = vsub.f32 %v641, %v752
        %v800 = vsub.f32 %v646, %v754
        %v801 = vsub.f32 %v651, %v756
        %v802 = vsub.f32 %v656, %v758
        %v803 = vsub.f32 %v661, %v760
        %v804 = vsub.f32 %v666, %v762
        %v805 = vsub.f32 %v671, %v764
        %v806 = vsub.f32 %v676, %v766
        %v807 = vsub.f32 %v681, %v768
        %v808 = vsub.f32 %v686, %v770
        %v809 = vsub.f32 %v691, %v772
        %v810 = vsub.f32 %v696, %v774
        %v811 = vsub.f32 %v701, %v776
        %v812 = vsub.f32 %v706, %v778
        %v813 = vsub.f32 %v711, %v780
        %v814 = vsub.f32 %v716, %v782
        %v815 = vmul.f32 %v783, 1.442695
        %v816 = vpow.pop %v815
        %v817 = vmul.f32 %v784, 1.442695
        %v818 = vpow.pop %v817
        %v819 = vmul.f32 %v785, 1.442695
        %v820 = vpow.pop %v819
        %v821 = vmul.f32 %v786, 1.442695
        %v822 = vpow.pop %v821
        %v823 = vmul.f32 %v787, 1.442695
        %v824 = vpow.pop %v823
        %v825 = vmul.f32 %v788, 1.442695
        %v826 = vpow.pop %v825
        %v827 = vmul.f32 %v789, 1.442695
        %v828 = vpow.pop %v827
        %v829 = vmul.f32 %v790, 1.442695
        %v830 = vpow.pop %v829
        %v831 = vmul.f32 %v791, 1.442695
        %v832 = vpow.pop %v831
        %v833 = vmul.f32 %v792, 1.442695
        %v834 = vpow.pop %v833
        %v835 = vmul.f32 %v793, 1.442695
        %v836 = vpow.pop %v835
        %v837 = vmul.f32 %v794, 1.442695
        %v838 = vpow.pop %v837
        %v839 = vmul.f32 %v795, 1.442695
        %v840 = vpow.pop %v839
        %v841 = vmul.f32 %v796, 1.442695
        %v842 = vpow.pop %v841
        %v843 = vmul.f32 %v797, 1.442695
        %v844 = vpow.pop %v843
        %v845 = vmul.f32 %v798, 1.442695
        %v846 = vpow.pop %v845
        %v847 = vmul.f32 %v799, 1.442695
        %v848 = vpow.pop %v847
        %v849 = vmul.f32 %v800, 1.442695
        %v850 = vpow.pop %v849
        %v851 = vmul.f32 %v801, 1.442695
        %v852 = vpow.pop %v851
        %v853 = vmul.f32 %v802, 1.442695
        %v854 = vpow.pop %v853
        %v855 = vmul.f32 %v803, 1.442695
        %v856 = vpow.pop %v855
        %v857 = vmul.f32 %v804, 1.442695
        %v858 = vpow.pop %v857
        %v859 = vmul.f32 %v805, 1.442695
        %v860 = vpow.pop %v859
        %v861 = vmul.f32 %v806, 1.442695
        %v862 = vpow.pop %v861
        %v863 = vmul.f32 %v807, 1.442695
        %v864 = vpow.pop %v863
        %v865 = vmul.f32 %v808, 1.442695
        %v866 = vpow.pop %v865
        %v867 = vmul.f32 %v809, 1.442695
        %v868 = vpow.pop %v867
        %v869 = vmul.f32 %v810, 1.442695
        %v870 = vpow.pop %v869
        %v871 = vmul.f32 %v811, 1.442695
        %v872 = vpow.pop %v871
        %v873 = vmul.f32 %v812, 1.442695
        %v874 = vpow.pop %v873
        %v875 = vmul.f32 %v813, 1.442695
        %v876 = vpow.pop %v875
        %v877 = vmul.f32 %v814, 1.442695
        %v878 = vpow.pop %v877
        %879 = vadd.xlane.f32.xlu0 %v816
        %v880 = vpop.xlane.xlu0 %879
        %881 = vadd.xlane.f32.xlu0 %v818
        %v882 = vpop.xlane.xlu0 %881
        %883 = vadd.xlane.f32.xlu0 %v820
        %v884 = vpop.xlane.xlu0 %883
        %885 = vadd.xlane.f32.xlu0 %v822
        %v886 = vpop.xlane.xlu0 %885
        %887 = vadd.xlane.f32.xlu0 %v824
        %v888 = vpop.xlane.xlu0 %887
        %889 = vadd.xlane.f32.xlu0 %v826
        %v890 = vpop.xlane.xlu0 %889
        %891 = vadd.xlane.f32.xlu0 %v828
        %v892 = vpop.xlane.xlu0 %891
        %893 = vadd.xlane.f32.xlu0 %v830
        %v894 = vpop.xlane.xlu0 %893
        %895 = vadd.xlane.f32.xlu0 %v832
        %v896 = vpop.xlane.xlu0 %895
        %897 = vadd.xlane.f32.xlu0 %v834
        %v898 = vpop.xlane.xlu0 %897
        %899 = vadd.xlane.f32.xlu0 %v836
        %v900 = vpop.xlane.xlu0 %899
        %901 = vadd.xlane.f32.xlu0 %v838
        %v902 = vpop.xlane.xlu0 %901
        %903 = vadd.xlane.f32.xlu0 %v840
        %v904 = vpop.xlane.xlu0 %903
        %905 = vadd.xlane.f32.xlu0 %v842
        %v906 = vpop.xlane.xlu0 %905
        %907 = vadd.xlane.f32.xlu0 %v844
        %v908 = vpop.xlane.xlu0 %907
        %909 = vadd.xlane.f32.xlu0 %v846
        %v910 = vpop.xlane.xlu0 %909
        %911 = vadd.xlane.f32.xlu0 %v848
        %v912 = vpop.xlane.xlu0 %911
        %913 = vadd.xlane.f32.xlu0 %v850
        %v914 = vpop.xlane.xlu0 %913
        %915 = vadd.xlane.f32.xlu0 %v852
        %v916 = vpop.xlane.xlu0 %915
        %917 = vadd.xlane.f32.xlu0 %v854
        %v918 = vpop.xlane.xlu0 %917
        %919 = vadd.xlane.f32.xlu0 %v856
        %v920 = vpop.xlane.xlu0 %919
        %921 = vadd.xlane.f32.xlu0 %v858
        %v922 = vpop.xlane.xlu0 %921
        %923 = vadd.xlane.f32.xlu0 %v860
        %v924 = vpop.xlane.xlu0 %923
        %925 = vadd.xlane.f32.xlu0 %v862
        %v926 = vpop.xlane.xlu0 %925
        %927 = vadd.xlane.f32.xlu0 %v864
        %v928 = vpop.xlane.xlu0 %927
        %929 = vadd.xlane.f32.xlu0 %v866
        %v930 = vpop.xlane.xlu0 %929
        %931 = vadd.xlane.f32.xlu0 %v868
        %v932 = vpop.xlane.xlu0 %931
        %933 = vadd.xlane.f32.xlu0 %v870
        %v934 = vpop.xlane.xlu0 %933
        %935 = vadd.xlane.f32.xlu0 %v872
        %v936 = vpop.xlane.xlu0 %935
        %937 = vadd.xlane.f32.xlu0 %v874
        %v938 = vpop.xlane.xlu0 %937
        %939 = vadd.xlane.f32.xlu0 %v876
        %v940 = vpop.xlane.xlu0 %939
        %941 = vadd.xlane.f32.xlu0 %v878
        %v942 = vpop.xlane.xlu0 %941
        %943 = vmatprep.subr.mxu0 0.0
        %944 = vmatpush1.xpose.msra.mxu0 %v266
        %945 = vmatprep.subr.mxu0 0.0
        %946 = vmatpush1.xpose.msra.mxu0 0.0
        %947 = vmatprep.subr.mxu0 0.0
        %948 = vmatpush1.xpose.msra.mxu0 0.0
        %949 = vmatprep.subr.mxu0 0.0
        %950 = vmatpush1.xpose.msra.mxu0 0.0
        %951 = vmatprep.subr.mxu0 0.0
        %952 = vmatpush1.xpose.msra.mxu0 0.0
        %953 = vmatprep.subr.mxu0 0.0
        %954 = vmatpush1.xpose.msra.mxu0 0.0
        %955 = vmatprep.subr.mxu0 0.0
        %956 = vmatpush1.xpose.msra.mxu0 0.0
        %957 = vmatprep.subr.mxu0 0.0
        %958 = vmatpush1.xpose.msra.mxu0 0.0
        %959 = vmatprep.subr.mxu0 0.0
        %960 = vmatpush1.xpose.msra.mxu0 0.0
        %961 = vmatprep.subr.mxu0 0.0
        %962 = vmatpush1.xpose.msra.mxu0 0.0
        %963 = vmatprep.subr.mxu0 0.0
        %964 = vmatpush1.xpose.msra.mxu0 0.0
        %965 = vmatprep.subr.mxu0 0.0
        %966 = vmatpush1.xpose.msra.mxu0 0.0
        %967 = vmatprep.subr.mxu0 0.0
        %968 = vmatpush1.xpose.msra.mxu0 0.0
        %969 = vmatprep.subr.mxu0 0.0
        %970 = vmatpush1.xpose.msra.mxu0 0.0
        %971 = vmatprep.subr.mxu0 0.0
        %972 = vmatpush1.xpose.msra.mxu0 0.0
        %973 = vmatprep.subr.mxu0 0.0
        %974 = vmatpush1.xpose.msra.mxu0 0.0
        %975 = vmatprep.subr.mxu0 0.0
        %976 = vmatpush1.xpose.msra.mxu0 0.0
        %977 = vmatprep.subr.mxu0 0.0
        %978 = vmatpush1.xpose.msra.mxu0 0.0
        %979 = vmatprep.subr.mxu0 0.0
        %980 = vmatpush1.xpose.msra.mxu0 0.0
        %981 = vmatprep.subr.mxu0 0.0
        %982 = vmatpush1.xpose.msra.mxu0 0.0
        %983 = vmatprep.subr.mxu0 0.0
        %984 = vmatpush1.xpose.msra.mxu0 0.0
        %985 = vmatprep.subr.mxu0 0.0
        %986 = vmatpush1.xpose.msra.mxu0 0.0
        %987 = vmatprep.subr.mxu0 0.0
        %988 = vmatpush1.xpose.msra.mxu0 0.0
        %989 = vmatprep.subr.mxu0 0.0
        %990 = vmatpush1.xpose.msra.mxu0 0.0
        %991 = vmatprep.subr.mxu0 0.0
        %992 = vmatpush1.xpose.msra.mxu0 0.0
        %993 = vmatprep.subr.mxu0 0.0
        %994 = vmatpush1.xpose.msra.mxu0 0.0
        %995 = vmatprep.subr.mxu0 0.0
        %996 = vmatpush1.xpose.msra.mxu0 0.0
        %997 = vmatprep.subr.mxu0 0.0
        %998 = vmatpush1.xpose.msra.mxu0 0.0
        %999 = vmatprep.subr.mxu0 0.0
        %1000 = vmatpush1.xpose.msra.mxu0 0.0
        %1001 = vmatprep.subr.mxu0 0.0
        %1002 = vmatpush1.xpose.msra.mxu0 0.0
        %1003 = vmatprep.subr.mxu0 0.0
        %1004 = vmatpush1.xpose.msra.mxu0 0.0
        %1005 = vmatprep.subr.mxu0 0.0
        %1006 = vmatpush1.xpose.msra.mxu0 0.0
        %1007 = vmatprep.mubr.f32.mxu0 0.0
        %1008 = vmatmul.mubr.f32.gmra.mrb[0].mxu0 %v816
        %v1009 = vpop.f32.mrb[0].mxu0
        %v1010 = vadd.f32 0.0, %v1009
        %v1011 = vpop.f32.mrb[0].mxu0
        %1012 = vmatprep.mubr.f32.mxu0 0.0
        %1013 = vmatmul.mubr.f32.gmra.mrb[0].mxu0 %v818
        %v1014 = vpop.f32.mrb[0].mxu0
        %v1015 = vadd.f32 0.0, %v1014
        %v1016 = vpop.f32.mrb[0].mxu0
        %1017 = vmatprep.mubr.f32.mxu0 0.0
        %1018 = vmatmul.mubr.f32.gmra.mrb[0].mxu0 %v820
        %v1019 = vpop.f32.mrb[0].mxu0
        %v1020 = vadd.f32 0.0, %v1019
        %v1021 = vpop.f32.mrb[0].mxu0
        %1022 = vmatprep.mubr.f32.mxu0 0.0
        %1023 = vmatmul.mubr.f32.gmra.mrb[0].mxu0 %v822
        %v1024 = vpop.f32.mrb[0].mxu0
        %v1025 = vadd.f32 0.0, %v1024
        %v1026 = vpop.f32.mrb[0].mxu0
        %1027 = vmatprep.mubr.f32.mxu0 0.0
        %1028 = vmatmul.mubr.f32.gmra.mrb[0].mxu0 %v824
        %v1029 = vpop.f32.mrb[0].mxu0
        %v1030 = vadd.f32 0.0, %v1029
        %v1031 = vpop.f32.mrb[0].mxu0
        %1032 = vmatprep.mubr.f32.mxu0 0.0
        %1033 = vmatmul.mubr.f32.gmra.mrb[0].mxu0 %v826
        %v1034 = vpop.f32.mrb[0].mxu0
        %v1035 = vadd.f32 0.0, %v1034
        %v1036 = vpop.f32.mrb[0].mxu0
        %1037 = vmatprep.mubr.f32.mxu0 0.0
        %1038 = vmatmul.mubr.f32.gmra.mrb[0].mxu0 %v828
        %v1039 = vpop.f32.mrb[0].mxu0
        %v1040 = vadd.f32 0.0, %v1039
        %v1041 = vpop.f32.mrb[0].mxu0
        %1042 = vmatprep.mubr.f32.mxu0 0.0
        %1043 = vmatmul.mubr.f32.gmra.mrb[0].mxu0 %v830
        %v1044 = vpop.f32.mrb[0].mxu0
        %v1045 = vadd.f32 0.0, %v1044
        %v1046 = vpop.f32.mrb[0].mxu0
        %1047 = vmatprep.mubr.f32.mxu0 0.0
        %1048 = vmatmul.mubr.f32.gmra.mrb[0].mxu0 %v832
        %v1049 = vpop.f32.mrb[0].mxu0
        %v1050 = vadd.f32 0.0, %v1049
        %v1051 = vpop.f32.mrb[0].mxu0
        %1052 = vmatprep.mubr.f32.mxu0 0.0
        %1053 = vmatmul.mubr.f32.gmra.mrb[0].mxu0 %v834
        %v1054 = vpop.f32.mrb[0].mxu0
        %v1055 = vadd.f32 0.0, %v1054
        %v1056 = vpop.f32.mrb[0].mxu0
        %1057 = vmatprep.mubr.f32.mxu0 0.0
        %1058 = vmatmul.mubr.f32.gmra.mrb[0].mxu0 %v836
        %v1059 = vpop.f32.mrb[0].mxu0
        %v1060 = vadd.f32 0.0, %v1059
        %v1061 = vpop.f32.mrb[0].mxu0
        %1062 = vmatprep.mubr.f32.mxu0 0.0
        %1063 = vmatmul.mubr.f32.gmra.mrb[0].mxu0 %v838
        %v1064 = vpop.f32.mrb[0].mxu0
        %v1065 = vadd.f32 0.0, %v1064
        %v1066 = vpop.f32.mrb[0].mxu0
        %1067 = vmatprep.mubr.f32.mxu0 0.0
        %1068 = vmatmul.mubr.f32.gmra.mrb[0].mxu0 %v840
        %v1069 = vpop.f32.mrb[0].mxu0
        %v1070 = vadd.f32 0.0, %v1069
        %v1071 = vpop.f32.mrb[0].mxu0
        %1072 = vmatprep.mubr.f32.mxu0 0.0
        %1073 = vmatmul.mubr.f32.gmra.mrb[0].mxu0 %v842
        %v1074 = vpop.f32.mrb[0].mxu0
        %v1075 = vadd.f32 0.0, %v1074
        %v1076 = vpop.f32.mrb[0].mxu0
        %1077 = vmatprep.mubr.f32.mxu0 0.0
        %1078 = vmatmul.mubr.f32.gmra.mrb[0].mxu0 %v844
        %v1079 = vpop.f32.mrb[0].mxu0
        %v1080 = vadd.f32 0.0, %v1079
        %v1081 = vpop.f32.mrb[0].mxu0
        %1082 = vmatprep.mubr.f32.mxu0 0.0
        %1083 = vmatmul.mubr.f32.gmra.mrb[0].mxu0 %v846
        %v1084 = vpop.f32.mrb[0].mxu0
        %v1085 = vadd.f32 0.0, %v1084
        %v1086 = vpop.f32.mrb[0].mxu0
        %1087 = vdwg.mxu0
        %1088 = vmatprep.subr.mxu0 0.0
        %1089 = vmatpush1.xpose.msra.mxu0 %v267
        %1090 = vmatprep.subr.mxu0 0.0
        %1091 = vmatpush1.xpose.msra.mxu0 0.0
        %1092 = vmatprep.subr.mxu0 0.0
        %1093 = vmatpush1.xpose.msra.mxu0 0.0
        %1094 = vmatprep.subr.mxu0 0.0
        %1095 = vmatpush1.xpose.msra.mxu0 0.0
        %1096 = vmatprep.subr.mxu0 0.0
        %1097 = vmatpush1.xpose.msra.mxu0 0.0
        %1098 = vmatprep.subr.mxu0 0.0
        %1099 = vmatpush1.xpose.msra.mxu0 0.0
        %1100 = vmatprep.subr.mxu0 0.0
        %1101 = vmatpush1.xpose.msra.mxu0 0.0
        %1102 = vmatprep.subr.mxu0 0.0
        %1103 = vmatpush1.xpose.msra.mxu0 0.0
        %1104 = vmatprep.subr.mxu0 0.0
        %1105 = vmatpush1.xpose.msra.mxu0 0.0
        %1106 = vmatprep.subr.mxu0 0.0
        %1107 = vmatpush1.xpose.msra.mxu0 0.0
        %1108 = vmatprep.subr.mxu0 0.0
        %1109 = vmatpush1.xpose.msra.mxu0 0.0
        %1110 = vmatprep.subr.mxu0 0.0
        %1111 = vmatpush1.xpose.msra.mxu0 0.0
        %1112 = vmatprep.subr.mxu0 0.0
        %1113 = vmatpush1.xpose.msra.mxu0 0.0
        %1114 = vmatprep.subr.mxu0 0.0
        %1115 = vmatpush1.xpose.msra.mxu0 0.0
        %1116 = vmatprep.subr.mxu0 0.0
        %1117 = vmatpush1.xpose.msra.mxu0 0.0
        %1118 = vmatprep.subr.mxu0 0.0
        %1119 = vmatpush1.xpose.msra.mxu0 0.0
        %1120 = vmatprep.subr.mxu0 0.0
        %1121 = vmatpush1.xpose.msra.mxu0 0.0
        %1122 = vmatprep.subr.mxu0 0.0
        %1123 = vmatpush1.xpose.msra.mxu0 0.0
        %1124 = vmatprep.subr.mxu0 0.0
        %1125 = vmatpush1.xpose.msra.mxu0 0.0
        %1126 = vmatprep.subr.mxu0 0.0
        %1127 = vmatpush1.xpose.msra.mxu0 0.0
        %1128 = vmatprep.subr.mxu0 0.0
        %1129 = vmatpush1.xpose.msra.mxu0 0.0
        %1130 = vmatprep.subr.mxu0 0.0
        %1131 = vmatpush1.xpose.msra.mxu0 0.0
        %1132 = vmatprep.subr.mxu0 0.0
        %1133 = vmatpush1.xpose.msra.mxu0 0.0
        %1134 = vmatprep.subr.mxu0 0.0
        %1135 = vmatpush1.xpose.msra.mxu0 0.0
        %1136 = vmatprep.subr.mxu0 0.0
        %1137 = vmatpush1.xpose.msra.mxu0 0.0
        %1138 = vmatprep.subr.mxu0 0.0
        %1139 = vmatpush1.xpose.msra.mxu0 0.0
        %1140 = vmatprep.subr.mxu0 0.0
        %1141 = vmatpush1.xpose.msra.mxu0 0.0
        %1142 = vmatprep.subr.mxu0 0.0
        %1143 = vmatpush1.xpose.msra.mxu0 0.0
        %1144 = vmatprep.subr.mxu0 0.0
        %1145 = vmatpush1.xpose.msra.mxu0 0.0
        %1146 = vmatprep.subr.mxu0 0.0
        %1147 = vmatpush1.xpose.msra.mxu0 0.0
        %1148 = vmatprep.subr.mxu0 0.0
        %1149 = vmatpush1.xpose.msra.mxu0 0.0
        %1150 = vmatprep.subr.mxu0 0.0
        %1151 = vmatpush1.xpose.msra.mxu0 0.0
        %1152 = vmatprep.mubr.f32.mxu0 0.0
        %1153 = vmatmul.mubr.f32.gmra.mrb[0].mxu0 %v848
        %v1154 = vpop.f32.mrb[0].mxu0
        %v1155 = vadd.f32 0.0, %v1154
        %v1156 = vpop.f32.mrb[0].mxu0
        %1157 = vmatprep.mubr.f32.mxu0 0.0
        %1158 = vmatmul.mubr.f32.gmra.mrb[0].mxu0 %v850
        %v1159 = vpop.f32.mrb[0].mxu0
        %v1160 = vadd.f32 0.0, %v1159
        %v1161 = vpop.f32.mrb[0].mxu0
        %1162 = vmatprep.mubr.f32.mxu0 0.0
        %1163 = vmatmul.mubr.f32.gmra.mrb[0].mxu0 %v852
        %v1164 = vpop.f32.mrb[0].mxu0
        %v1165 = vadd.f32 0.0, %v1164
        %v1166 = vpop.f32.mrb[0].mxu0
        %1167 = vmatprep.mubr.f32.mxu0 0.0
        %1168 = vmatmul.mubr.f32.gmra.mrb[0].mxu0 %v854
        %v1169 = vpop.f32.mrb[0].mxu0
        %v1170 = vadd.f32 0.0, %v1169
        %v1171 = vpop.f32.mrb[0].mxu0
        %1172 = vmatprep.mubr.f32.mxu0 0.0
        %1173 = vmatmul.mubr.f32.gmra.mrb[0].mxu0 %v856
        %v1174 = vpop.f32.mrb[0].mxu0
        %v1175 = vadd.f32 0.0, %v1174
        %v1176 = vpop.f32.mrb[0].mxu0
        %1177 = vmatprep.mubr.f32.mxu0 0.0
        %1178 = vmatmul.mubr.f32.gmra.mrb[0].mxu0 %v858
        %v1179 = vpop.f32.mrb[0].mxu0
        %v1180 = vadd.f32 0.0, %v1179
        %v1181 = vpop.f32.mrb[0].mxu0
        %1182 = vmatprep.mubr.f32.mxu0 0.0
        %1183 = vmatmul.mubr.f32.gmra.mrb[0].mxu0 %v860
        %v1184 = vpop.f32.mrb[0].mxu0
        %v1185 = vadd.f32 0.0, %v1184
        %v1186 = vpop.f32.mrb[0].mxu0
        %1187 = vmatprep.mubr.f32.mxu0 0.0
        %1188 = vmatmul.mubr.f32.gmra.mrb[0].mxu0 %v862
        %v1189 = vpop.f32.mrb[0].mxu0
        %v1190 = vadd.f32 0.0, %v1189
        %v1191 = vpop.f32.mrb[0].mxu0
        %1192 = vmatprep.mubr.f32.mxu0 0.0
        %1193 = vmatmul.mubr.f32.gmra.mrb[0].mxu0 %v864
        %v1194 = vpop.f32.mrb[0].mxu0
        %v1195 = vadd.f32 0.0, %v1194
        %v1196 = vpop.f32.mrb[0].mxu0
        %1197 = vmatprep.mubr.f32.mxu0 0.0
        %1198 = vmatmul.mubr.f32.gmra.mrb[0].mxu0 %v866
        %v1199 = vpop.f32.mrb[0].mxu0
        %v1200 = vadd.f32 0.0, %v1199
        %v1201 = vpop.f32.mrb[0].mxu0
        %1202 = vmatprep.mubr.f32.mxu0 0.0
        %1203 = vmatmul.mubr.f32.gmra.mrb[0].mxu0 %v868
        %v1204 = vpop.f32.mrb[0].mxu0
        %v1205 = vadd.f32 0.0, %v1204
        %v1206 = vpop.f32.mrb[0].mxu0
        %1207 = vmatprep.mubr.f32.mxu0 0.0
        %1208 = vmatmul.mubr.f32.gmra.mrb[0].mxu0 %v870
        %v1209 = vpop.f32.mrb[0].mxu0
        %v1210 = vadd.f32 0.0, %v1209
        %v1211 = vpop.f32.mrb[0].mxu0
        %1212 = vmatprep.mubr.f32.mxu0 0.0
        %1213 = vmatmul.mubr.f32.gmra.mrb[0].mxu0 %v872
        %v1214 = vpop.f32.mrb[0].mxu0
        %v1215 = vadd.f32 0.0, %v1214
        %v1216 = vpop.f32.mrb[0].mxu0
        %1217 = vmatprep.mubr.f32.mxu0 0.0
        %1218 = vmatmul.mubr.f32.gmra.mrb[0].mxu0 %v874
        %v1219 = vpop.f32.mrb[0].mxu0
        %v1220 = vadd.f32 0.0, %v1219
        %v1221 = vpop.f32.mrb[0].mxu0
        %1222 = vmatprep.mubr.f32.mxu0 0.0
        %1223 = vmatmul.mubr.f32.gmra.mrb[0].mxu0 %v876
        %v1224 = vpop.f32.mrb[0].mxu0
        %v1225 = vadd.f32 0.0, %v1224
        %v1226 = vpop.f32.mrb[0].mxu0
        %1227 = vmatprep.mubr.f32.mxu0 0.0
        %1228 = vmatmul.mubr.f32.gmra.mrb[0].mxu0 %v878
        %v1229 = vpop.f32.mrb[0].mxu0
        %v1230 = vadd.f32 0.0, %v1229
        %v1231 = vpop.f32.mrb[0].mxu0
        %1232 = vdwg.mxu0
        %v1233 = vrcp.pop %v880
        %v1234 = vmul.f32 1.0, %v1233
        %v1235 = vrcp.pop %v882
        %v1236 = vmul.f32 1.0, %v1235
        %v1237 = vrcp.pop %v884
        %v1238 = vmul.f32 1.0, %v1237
        %v1239 = vrcp.pop %v886
        %v1240 = vmul.f32 1.0, %v1239
        %v1241 = vrcp.pop %v888
        %v1242 = vmul.f32 1.0, %v1241
        %v1243 = vrcp.pop %v890
        %v1244 = vmul.f32 1.0, %v1243
        %v1245 = vrcp.pop %v892
        %v1246 = vmul.f32 1.0, %v1245
        %v1247 = vrcp.pop %v894
        %v1248 = vmul.f32 1.0, %v1247
        %v1249 = vrcp.pop %v896
        %v1250 = vmul.f32 1.0, %v1249
        %v1251 = vrcp.pop %v898
        %v1252 = vmul.f32 1.0, %v1251
        %v1253 = vrcp.pop %v900
        %v1254 = vmul.f32 1.0, %v1253
        %v1255 = vrcp.pop %v902
        %v1256 = vmul.f32 1.0, %v1255
        %v1257 = vrcp.pop %v904
        %v1258 = vmul.f32 1.0, %v1257
        %v1259 = vrcp.pop %v906
        %v1260 = vmul.f32 1.0, %v1259
        %v1261 = vrcp.pop %v908
        %v1262 = vmul.f32 1.0, %v1261
        %v1263 = vrcp.pop %v910
        %v1264 = vmul.f32 1.0, %v1263
        %v1265 = vrcp.pop %v912
        %v1266 = vmul.f32 1.0, %v1265
        %v1267 = vrcp.pop %v914
        %v1268 = vmul.f32 1.0, %v1267
        %v1269 = vrcp.pop %v916
        %v1270 = vmul.f32 1.0, %v1269
        %v1271 = vrcp.pop %v918
        %v1272 = vmul.f32 1.0, %v1271
        %v1273 = vrcp.pop %v920
        %v1274 = vmul.f32 1.0, %v1273
        %v1275 = vrcp.pop %v922
        %v1276 = vmul.f32 1.0, %v1275
        %v1277 = vrcp.pop %v924
        %v1278 = vmul.f32 1.0, %v1277
        %v1279 = vrcp.pop %v926
        %v1280 = vmul.f32 1.0, %v1279
        %v1281 = vrcp.pop %v928
        %v1282 = vmul.f32 1.0, %v1281
        %v1283 = vrcp.pop %v930
        %v1284 = vmul.f32 1.0, %v1283
        %v1285 = vrcp.pop %v932
        %v1286 = vmul.f32 1.0, %v1285
        %v1287 = vrcp.pop %v934
        %v1288 = vmul.f32 1.0, %v1287
        %v1289 = vrcp.pop %v936
        %v1290 = vmul.f32 1.0, %v1289
        %v1291 = vrcp.pop %v938
        %v1292 = vmul.f32 1.0, %v1291
        %v1293 = vrcp.pop %v940
        %v1294 = vmul.f32 1.0, %v1293
        %v1295 = vrcp.pop %v942
        %v1296 = vmul.f32 1.0, %v1295
        %v1297 = vmul.f32 %v1010, %v1234
        %v1298 = vmul.f32 %v1015, %v1236
        %v1299 = vmul.f32 %v1020, %v1238
        %v1300 = vmul.f32 %v1025, %v1240
        %v1301 = vmul.f32 %v1030, %v1242
        %v1302 = vmul.f32 %v1035, %v1244
        %v1303 = vmul.f32 %v1040, %v1246
        %v1304 = vmul.f32 %v1045, %v1248
        %v1305 = vmul.f32 %v1050, %v1250
        %v1306 = vmul.f32 %v1055, %v1252
        %v1307 = vmul.f32 %v1060, %v1254
        %v1308 = vmul.f32 %v1065, %v1256
        %v1309 = vmul.f32 %v1070, %v1258
        %v1310 = vmul.f32 %v1075, %v1260
        %v1311 = vmul.f32 %v1080, %v1262
        %v1312 = vmul.f32 %v1085, %v1264
        %v1313 = vmul.f32 %v1155, %v1266
        %v1314 = vmul.f32 %v1160, %v1268
        %v1315 = vmul.f32 %v1165, %v1270
        %v1316 = vmul.f32 %v1170, %v1272
        %v1317 = vmul.f32 %v1175, %v1274
        %v1318 = vmul.f32 %v1180, %v1276
        %v1319 = vmul.f32 %v1185, %v1278
        %v1320 = vmul.f32 %v1190, %v1280
        %v1321 = vmul.f32 %v1195, %v1282
        %v1322 = vmul.f32 %v1200, %v1284
        %v1323 = vmul.f32 %v1205, %v1286
        %v1324 = vmul.f32 %v1210, %v1288
        %v1325 = vmul.f32 %v1215, %v1290
        %v1326 = vmul.f32 %v1220, %v1292
        %v1327 = vmul.f32 %v1225, %v1294
        %v1328 = vmul.f32 %v1230, %v1296
        %1329 = vxpose.xlu0.b32.start [1/16] %v1297, 128
        %1330 = vxpose.xlu0.b32.cont [2/16] %v1298, 128
        %1331 = vxpose.xlu0.b32.cont [3/16] %v1299, 128
        %1332 = vxpose.xlu0.b32.cont [4/16] %v1300, 128
        %1333 = vxpose.xlu0.b32.cont [5/16] %v1301, 128
        %1334 = vxpose.xlu0.b32.cont [6/16] %v1302, 128
        %1335 = vxpose.xlu0.b32.cont [7/16] %v1303, 128
        %1336 = vxpose.xlu0.b32.cont [8/16] %v1304, 128
        %1337 = vxpose.xlu0.b32.cont [9/16] %v1305, 128
        %1338 = vxpose.xlu0.b32.cont [10/16] %v1306, 128
        %1339 = vxpose.xlu0.b32.cont [11/16] %v1307, 128
        %1340 = vxpose.xlu0.b32.cont [12/16] %v1308, 128
        %1341 = vxpose.xlu0.b32.cont [13/16] %v1309, 128
        %1342 = vxpose.xlu0.b32.cont [14/16] %v1310, 128
        %1343 = vxpose.xlu0.b32.cont [15/16] %v1311, 128
        %1344 = vxpose.xlu0.b32.end [16/16] %v1312, 128
        %v1345 = vpop.trf.xlu0
        %v1346 = vpop.trf.xlu0
        %v1347 = vpop.trf.xlu0
        %v1348 = vpop.trf.xlu0
        %v1349 = vpop.trf.xlu0
        %v1350 = vpop.trf.xlu0
        %v1351 = vpop.trf.xlu0
        %v1352 = vpop.trf.xlu0
        %v1353 = vpop.trf.xlu0
        %v1354 = vpop.trf.xlu0
        %v1355 = vpop.trf.xlu0
        %v1356 = vpop.trf.xlu0
        %v1357 = vpop.trf.xlu0
        %v1358 = vpop.trf.xlu0
        %v1359 = vpop.trf.xlu0
        %v1360 = vpop.trf.xlu0
        %1361 = vxpose.xlu0.b32.start [1/16] %v1313, 128
        %1362 = vxpose.xlu0.b32.cont [2/16] %v1314, 128
        %1363 = vxpose.xlu0.b32.cont [3/16] %v1315, 128
        %1364 = vxpose.xlu0.b32.cont [4/16] %v1316, 128
        %1365 = vxpose.xlu0.b32.cont [5/16] %v1317, 128
        %1366 = vxpose.xlu0.b32.cont [6/16] %v1318, 128
        %1367 = vxpose.xlu0.b32.cont [7/16] %v1319, 128
        %1368 = vxpose.xlu0.b32.cont [8/16] %v1320, 128
        %1369 = vxpose.xlu0.b32.cont [9/16] %v1321, 128
        %1370 = vxpose.xlu0.b32.cont [10/16] %v1322, 128
        %1371 = vxpose.xlu0.b32.cont [11/16] %v1323, 128
        %1372 = vxpose.xlu0.b32.cont [12/16] %v1324, 128
        %1373 = vxpose.xlu0.b32.cont [13/16] %v1325, 128
        %1374 = vxpose.xlu0.b32.cont [14/16] %v1326, 128
        %1375 = vxpose.xlu0.b32.cont [15/16] %v1327, 128
        %1376 = vxpose.xlu0.b32.end [16/16] %v1328, 128
        %v1377 = vpop.trf.xlu0
        %v1378 = vpop.trf.xlu0
        %v1379 = vpop.trf.xlu0
        %v1380 = vpop.trf.xlu0
        %v1381 = vpop.trf.xlu0
        %v1382 = vpop.trf.xlu0
        %v1383 = vpop.trf.xlu0
        %v1384 = vpop.trf.xlu0
        %v1385 = vpop.trf.xlu0
        %v1386 = vpop.trf.xlu0
        %v1387 = vpop.trf.xlu0
        %v1388 = vpop.trf.xlu0
        %v1389 = vpop.trf.xlu0
        %v1390 = vpop.trf.xlu0
        %v1391 = vpop.trf.xlu0
        %v1392 = vpop.trf.xlu0
        %1393 = vst [vmem:[%s255] sm:$0xff] %v1345
        %1394 = vst [vmem:[%s255 + $0x8] sm:$0xff] %v1377
        %s1395 = sand.u32 %s123, 1
        %s1396 = scalar_lea.sflag [#allocation4], %s1395
        %s1397 = sand.u32 %s123, 1
        %s1398 = smul.addr %s1397, 16
        %s1399 = scalar_lea.vmem [#allocation8], %s1398
        // Predicated region
        $region45: #{tpu_custom_call.1} parent=31 // pred_check
          %p1400 = pneg %p133
        $region46: #{tpu_custom_call.1} parent=31 // pred_check_branch
          %1402 = sbr.rel (%p1400) target = $region48
        $region47: #{tpu_custom_call.1} parent=31 // pred_region
          %s1403 = smul.u32 2, %s25
          %s1405 = ssub.s32 256, 256
          %1406 = vsyncadd %s1396, %s1405
          %s1407 = sadd.s32 %s26, %s1403
          %s1408 = smul.addr %s1407, 128
          %s1409 = scalar_lea.hbm %s3, %s1408
          %s1410 = sshll.u32 %s1399, 4
          %s1411 = int_to_ptr.vmem [resolvable:$true] %s1410
          %1416 = dma.vmem_to_hbm [thread:$0]  %s1411, 256, %s1409, %s1396, 128, 128, 8
        $region48: #{tpu_custom_call.1} parent=31 // pred_fallthru
          _
      $region32: #{tpu_custom_call.1} parent=5 // pred_fallthru
        _
      %p1417 = scmp.le.s32.totalorder 2, %s16
      // Predicated region
      $region49: #{tpu_custom_call.1} parent=5 // pred_check
        %p1418 = pneg %p1417
      $region50: #{tpu_custom_call.1} parent=5 // pred_check_branch
        %1420 = sbr.rel (%p1418) target = $region52
      $region51: #{tpu_custom_call.1} parent=5 // pred_region
        %s1421 = ssub.s32 %s16, 2
        // Predicated region
        $region53: #{tpu_custom_call.1} parent=51 // pred_check
          %p1422 = pneg %p139
        $region54: #{tpu_custom_call.1} parent=51 // pred_check_branch
          %1424 = sbr.rel (%p1422) target = $region56
        $region55: #{tpu_custom_call.1} parent=51 // pred_region
          %s1425 = sand.u32 %s124, 1
          %s1426 = scalar_lea.sflag [#allocation4], %s1425
          %s1427 = sand.u32 %s124, 1
          %s1428 = smul.addr %s1427, 16
          %s1429 = scalar_lea.vmem [#allocation8], %s1428
          %1430 = dma.done %s1426, 256
        $region56: #{tpu_custom_call.1} parent=51 // pred_fallthru
          _
      $region52: #{tpu_custom_call.1} parent=5 // pred_fallthru
        _
    $region6: #{tpu_custom_call.1} parent=1 // loop_footer
      %s20 = sadd.s32 1, %s16
    $region7: #{tpu_custom_call.1} parent=1 // loop_footer_branch
      %15 = sbr.rel target = $region3
    $region8: #{tpu_custom_call.1} parent=1 // loop_exit
      _
    %1431 = vsyncpa [#allocation3], 1
    %s1432 = scalar_lea.sflag [#allocation3], 1
    %1433 = vsyncpa %s1432, 1
    %1434 = vsyncpa [#allocation6], 1
    %1435 = vsyncpa [#allocation4], 1
    %s1436 = scalar_lea.sflag [#allocation4], 1
    %1437 = vsyncpa %s1436, 1

</llo_original>
